<compile_context>
chip_gen: v6e
topology: v6e:2x2x1
jax: 0.10.0
libtpu: 0.0.40
codegen_flags: <defaults>
</compile_context>

<pallas_src>
import jax
import jax.numpy as jnp
import numpy as np
from jax.experimental import pallas as pl
from jax.experimental.pallas import tpu as pltpu

# ----- config (small, consistent with the module's __init__) -----
N_CHANNELS = 4
SEQ_LEN = 16
PRED_LEN = 8
KERNEL_SIZE = 5          # odd kernel -> moving-average output length == seq_len
WINDOW_LEN = 4           # unused, see TODO below
N_CHOICES = 3            # unused, see TODO below
BATCH = 2
EPS = 1e-5

# TODO(synk): TrendPointEstimator / SeasonPointEstimator source was not provided;
# they are implemented as per-channel Linear(seq_len -> pred_len) point heads,
# so window_len / n_choices are unused.  The RevIN denorm convention
# (divide by gamma + EPS^2) matches the in-file reference; verify against the
# actual RevIN implementation if it differs.


def _pointid_ar_kernel(x_ref, w_ref, m_ref, b_ref, out_ref):
    """One invocation handles the full forward for all channels.

    x_ref  : (B, L*C)   natural flatten of the input
    w_ref  : (L*C, P*C) block-diagonal fused weight (heads + decomposition +
                        RevIN affine + mean-correction folded in)
    m_ref  : (L*C, P*C) block-diagonal mean-pooling matrix (1/L on own channel)
    b_ref  : (1, P*C)   fused bias (to be scaled by per-sample/channel stdev)
    out_ref: (B, P*C)
    """
    x = x_ref[...]                                                        # (B, L*C)

    # Main path: one lane-dense MXU matmul (normalization scale cancels exactly).
    y = jnp.dot(x, w_ref[...], preferred_element_type=jnp.float32)       # (B, P*C)

    # RevIN statistics via matmul pooling (no strided reductions / tiling):
    # mean_t[b, p*C+c] = mean_l x[b, l, c]   (replicated over p, so it already
    # lines up column-for-column with the output).
    mean_t = jnp.dot(x, m_ref[...], preferred_element_type=jnp.float32)  # (B, P*C)
    msq_t = jnp.dot(x * x, m_ref[...], preferred_element_type=jnp.float32)
    var_t = msq_t - mean_t * mean_t
    stdev = jnp.sqrt(var_t + EPS)                                         # (B, P*C)

    out_ref[...] = (y + b_ref[...] * stdev).astype(out_ref.dtype)


@jax.jit
def point_id_ar_forward(x, w_bd, m2, b_cols):
    """x: (B, seq_len, n_channels) -> (B, pred_len, n_channels)."""
    B, L, C = x.shape
    PC = w_bd.shape[-1]
    P = PC // C

    x_flat = x.reshape(B, L * C).astype(jnp.float32)          # metadata-only reshape

    out_flat = pl.pallas_call(
        _pointid_ar_kernel,
        out_shape=jax.ShapeDtypeStruct((B, PC), jnp.float32),
        in_specs=[
            pl.BlockSpec(memory_space=pltpu.MemorySpace.VMEM),   # x_flat (B, L*C)
            pl.BlockSpec(memory_space=pltpu.MemorySpace.VMEM),   # W_bd   (L*C, P*C)
            pl.BlockSpec(memory_space=pltpu.MemorySpace.VMEM),   # M2     (L*C, P*C)
            pl.BlockSpec(memory_space=pltpu.MemorySpace.VMEM),   # b_cols (1, P*C)
        ],
        out_specs=pl.BlockSpec(memory_space=pltpu.MemorySpace.VMEM),
    )(x_flat, w_bd, m2, b_cols)

    return out_flat.reshape(B, P, C)                           # free reshape (B, P, C)


def build_avg_matrix(L, k):
    """Linear operator of Autoformer-style moving average with replicate padding
    (applied as xn @ A)."""
    h = (k - 1) // 2
    A = np.zeros((L, L), np.float32)
    for t in range(L):
        for j in range(t - h, t - h + k):
            s = min(max(j, 0), L - 1)
            A[s, t] += 1.0 / k
    return jnp.asarray(A)


def fold_params(params):
    """Host-side, done once: fold decomposition + trend/season heads + RevIN
    affine + denorm + mean-correction into one block-diagonal weight.

    Per channel c (g = gamma/(gamma+EPS^2), Wf = A@Wt + (I-A)@Ws,
    S[p] = sum_l Wf[l,p], bf = bt + bs):
        out[b,p,c] = sum_l x[b,l,c] * (g*Wf[l,p] + (1 - g*S[p])/L)
                     + (beta*(S[p]-1) + bf[p])/(gamma+EPS^2) * stdev[b,c]
    Rows are laid out l*C + c and columns p*C + c so the kernel consumes the
    natural flatten of x and produces an output that reshapes freely to (B,P,C).
    """
    L, P, C = SEQ_LEN, PRED_LEN, N_CHANNELS
    A = params["avg_mat"]                                          # (L, L)
    I = jnp.eye(L, dtype=jnp.float32)
    Wf = (jnp.einsum('st,ctp->csp', A, params["w_trend"])
          + jnp.einsum('st,ctp->csp', I - A, params["w_season"]))  # (C, L, P)
    bf = params["b_trend"][:, 0, :] + params["b_season"][:, 0, :]  # (C, P)

    gamma = params["gamma"]                                        # (C,)
    beta = params["beta"]                                          # (C,)
    denom = gamma + EPS * EPS                                      # RevIN denorm convention
    g = gamma / denom                                              # (C,)
    S = Wf.sum(axis=1)                                             # (C, P)

    # Fused per-channel weight (mean-correction folded in) and bias.
    W_final = g[:, None, None] * Wf + ((1.0 - g[:, None] * S) / L)[:, None, :]  # (C,L,P)
    b_fold = (beta[:, None] * (S - 1.0) + bf) / denom[:, None]                  # (C,P)

    # Block-diagonal expansion: row l*C + c, column p*C + c.
    eye_c = jnp.eye(C, dtype=jnp.float32)
    W_bd = (jnp.transpose(W_final, (1, 0, 2))[:, :, :, None]
            * eye_c[None, :, None, :]).reshape(L * C, P * C)
    M2 = ((jnp.ones((L, 1, P, 1), jnp.float32) / L)
          * eye_c[None, :, None, :]).reshape(L * C, P * C)
    b_cols = jnp.transpose(b_fold, (1, 0)).reshape(1, P * C)

    return (W_bd.astype(jnp.float32), M2.astype(jnp.float32),
            b_cols.astype(jnp.float32))


def init_params(key):
    k1, k2, k3, k4, k5, k6 = jax.random.split(key, 6)
    bound = 1.0 / np.sqrt(SEQ_LEN)
    u = lambda k, shape: jax.random.uniform(k, shape, jnp.float32, -bound, bound)
    return {
        "w_trend":  u(k1, (N_CHANNELS, SEQ_LEN, PRED_LEN)),
        "b_trend":  u(k2, (N_CHANNELS, 1, PRED_LEN)),
        "w_season": u(k3, (N_CHANNELS, SEQ_LEN, PRED_LEN)),
        "b_season": u(k4, (N_CHANNELS, 1, PRED_LEN)),
        # RevIN affine (init would be ones/zeros; perturb so the path is non-trivial)
        "gamma": 1.0 + 0.1 * jax.random.normal(k5, (N_CHANNELS,), jnp.float32),
        "beta":  0.05 * jax.random.normal(k6, (N_CHANNELS,), jnp.float32),
        "avg_mat": build_avg_matrix(SEQ_LEN, KERNEL_SIZE),
    }


def reference_forward(x, params):
    """Pure-JAX reference mirroring the PyTorch forward (unfused math)."""
    gamma, beta = params["gamma"], params["beta"]
    mean = jnp.mean(x, axis=1, keepdims=True)                 # (B,1,C)
    var = jnp.mean((x - mean) ** 2, axis=1, keepdims=True)
    stdev = jnp.sqrt(var + EPS)
    xn = (x - mean) / stdev * gamma + beta                    # (B,L,C)
    trend = jnp.einsum('blc,lt->btc', xn, params["avg_mat"])  # (B,L,C)
    season = xn - trend
    outs = []
    for c in range(x.shape[-1]):
        t = trend[:, :, c] @ params["w_trend"][c] + params["b_trend"][c, 0]
        s = season[:, :, c] @ params["w_season"][c] + params["b_season"][c, 0]
        outs.append(t + s)
    out = jnp.stack(outs, axis=-1)                            # (B,P,C)
    out = (out - beta) / (gamma + EPS * EPS) * stdev + mean
    return out


if __name__ == "__main__":
    key = jax.random.PRNGKey(0)
    k_x, k_p = jax.random.split(key)
    x = jax.random.normal(k_x, (BATCH, SEQ_LEN, N_CHANNELS), jnp.float32)
    params = init_params(k_p)
    w_bd, m2, b_cols = fold_params(params)

    out = jax.block_until_ready(point_id_ar_forward(x, w_bd, m2, b_cols))
    ref = jax.block_until_ready(reference_forward(x, params))

    assert out.shape == (BATCH, PRED_LEN, N_CHANNELS)
    np.testing.assert_allclose(np.asarray(out), np.asarray(ref), rtol=1e-4, atol=1e-4)
    print("KERNEL_OK")
</pallas_src>

<mosaic_0001>
module attributes {stable_mosaic.version = 11 : i64} {
  func.func @_pointid_ar_kernel(%arg0: memref<2x64xf32, #tpu.memory_space<vmem>>, %arg1: memref<64x32xf32, #tpu.memory_space<vmem>>, %arg2: memref<64x32xf32, #tpu.memory_space<vmem>>, %arg3: memref<1x32xf32, #tpu.memory_space<vmem>>, %arg4: memref<2x32xf32, #tpu.memory_space<vmem>>) attributes {dimension_semantics = [], scalar_prefetch = 0 : i64, scratch_operands = 0 : i64, tpu.core_type = #tpu.core_type<tc>} {
    %c0 = arith.constant 0 : index
    %c0_0 = arith.constant 0 : index
    %0 = vector.load %arg0[%c0, %c0_0] : memref<2x64xf32, #tpu.memory_space<vmem>>, vector<2x64xf32>
    %c0_1 = arith.constant 0 : index
    %c0_2 = arith.constant 0 : index
    %1 = vector.load %arg1[%c0_1, %c0_2] : memref<64x32xf32, #tpu.memory_space<vmem>>, vector<64x32xf32>
    %cst = arith.constant dense<0.000000e+00> : vector<2x32xf32>
    %2 = tpu.matmul %0, %1, %cst {dimension_numbers = #tpu.dot_dimension_numbers<[1], [0], [0], [1], [0, 0, 1, 1], [], []>} : vector<2x64xf32>, vector<64x32xf32>, vector<2x32xf32> -> vector<2x32xf32>
    %c0_3 = arith.constant 0 : index
    %c0_4 = arith.constant 0 : index
    %3 = vector.load %arg2[%c0_3, %c0_4] : memref<64x32xf32, #tpu.memory_space<vmem>>, vector<64x32xf32>
    %cst_5 = arith.constant dense<0.000000e+00> : vector<2x32xf32>
    %4 = tpu.matmul %0, %3, %cst_5 {dimension_numbers = #tpu.dot_dimension_numbers<[1], [0], [0], [1], [0, 0, 1, 1], [], []>} : vector<2x64xf32>, vector<64x32xf32>, vector<2x32xf32> -> vector<2x32xf32>
    %5 = arith.mulf %0, %0 : vector<2x64xf32>
    %c0_6 = arith.constant 0 : index
    %c0_7 = arith.constant 0 : index
    %6 = vector.load %arg2[%c0_6, %c0_7] : memref<64x32xf32, #tpu.memory_space<vmem>>, vector<64x32xf32>
    %cst_8 = arith.constant dense<0.000000e+00> : vector<2x32xf32>
    %7 = tpu.matmul %5, %6, %cst_8 {dimension_numbers = #tpu.dot_dimension_numbers<[1], [0], [0], [1], [0, 0, 1, 1], [], []>} : vector<2x64xf32>, vector<64x32xf32>, vector<2x32xf32> -> vector<2x32xf32>
    %8 = arith.mulf %4, %4 : vector<2x32xf32>
    %9 = arith.subf %7, %8 : vector<2x32xf32>
    %cst_9 = arith.constant 9.99999974E-6 : f32
    %10 = vector.broadcast %cst_9 : f32 to vector<2x32xf32>
    %11 = arith.addf %9, %10 : vector<2x32xf32>
    %12 = math.sqrt %11 : vector<2x32xf32>
    %c0_10 = arith.constant 0 : index
    %c0_11 = arith.constant 0 : index
    %13 = vector.load %arg3[%c0_10, %c0_11] : memref<1x32xf32, #tpu.memory_space<vmem>>, vector<1x32xf32>
    %14 = vector.broadcast %13 : vector<1x32xf32> to vector<2x32xf32>
    %15 = arith.mulf %14, %12 : vector<2x32xf32>
    %16 = arith.addf %2, %15 : vector<2x32xf32>
    %c0_12 = arith.constant 0 : index
    %c0_13 = arith.constant 0 : index
    %17 = vector.load %arg4[%c0_12, %c0_13] : memref<2x32xf32, #tpu.memory_space<vmem>>, vector<2x32xf32>
    tpu.vector_store %arg4[%c0_12, %c0_13], %16 {strides = array<i32>} : memref<2x32xf32, #tpu.memory_space<vmem>>, vector<2x32xf32>,
    return
  }
}

</mosaic_0001>

<llo_original>
// kernel: point_id_ar_forward.1
$region0: #{point_id_ar_forward.1}
  #allocation0 [shape = 'u32[]', space=smem, size = 0x4, offset = 0x4, fixed_abs, tag = 'smem constant byte address 0x4 - core index']
  #allocation1 [shape = 'u32[144,128]{1,0:T(1,128)}', space=vmem, size = 0x12000, scoped, tag = 'internal scratch']
  %s0 = inlined_call_operand.vmem [shape: f32[2,64], index: 0, kind: input, shape index: {}]
  %s1 = inlined_call_operand.vmem [shape: f32[64,32], index: 1, kind: input, shape index: {}]
  %s2 = inlined_call_operand.vmem [shape: f32[64,32], index: 2, kind: input, shape index: {}]
  %s3 = inlined_call_operand.vmem [shape: f32[1,32], index: 3, kind: input, shape index: {}]
  %s4 = inlined_call_operand.vmem [shape: f32[2,32], index: 4, kind: output, shape index: {}]
  %s5 = sld [smem:[#allocation0]]
  $region26: #{point_id_ar_forward.1} parent=0
    _
  %s7 = ssub.s32 1, %s5
  %s8 = scalar_select 0, %s7, %s5
  // Predicated region
  $region2: #{point_id_ar_forward.1} parent=0 // pred_check
    _
  $region3: #{point_id_ar_forward.1} parent=0 // pred_check_branch
    %10 = sbr.rel (0) target = $region5
  $region4: #{point_id_ar_forward.1} parent=0 // pred_region
    _
  $region5: #{point_id_ar_forward.1} parent=0 // pred_fallthru
    _
  // Predicated region
  $region6: #{point_id_ar_forward.1} parent=0 // pred_check
    _
  $region7: #{point_id_ar_forward.1} parent=0 // pred_check_branch
    %12 = sbr.rel (0) target = $region9
  $region8: #{point_id_ar_forward.1} parent=0 // pred_region
    _
  $region9: #{point_id_ar_forward.1} parent=0 // pred_fallthru
    _
  // Predicated region
  $region10: #{point_id_ar_forward.1} parent=0 // pred_check
    _
  $region11: #{point_id_ar_forward.1} parent=0 // pred_check_branch
    %14 = sbr.rel (0) target = $region13
  $region12: #{point_id_ar_forward.1} parent=0 // pred_region
    _
  $region13: #{point_id_ar_forward.1} parent=0 // pred_fallthru
    _
  // Predicated region
  $region14: #{point_id_ar_forward.1} parent=0 // pred_check
    _
  $region15: #{point_id_ar_forward.1} parent=0 // pred_check_branch
    %16 = sbr.rel (0) target = $region17
  $region16: #{point_id_ar_forward.1} parent=0 // pred_region
    _
  $region17: #{point_id_ar_forward.1} parent=0 // pred_fallthru
    _
  %v17 = vld [vmem:[%s0] sm:$0x3]
  %v18 = vld [vmem:[%s1] sm:$0xff]
  %v19 = vld [vmem:[%s1 + $0x8] sm:$0xff]
  %v20 = vld [vmem:[%s1 + $0x10] sm:$0xff]
  %v21 = vld [vmem:[%s1 + $0x18] sm:$0xff]
  %v22 = vld [vmem:[%s1 + $0x20] sm:$0xff]
  %v23 = vld [vmem:[%s1 + $0x28] sm:$0xff]
  %v24 = vld [vmem:[%s1 + $0x30] sm:$0xff]
  %v25 = vld [vmem:[%s1 + $0x38] sm:$0xff]
  %v26 = vld [vmem:[%s2] sm:$0xff]
  %v27 = vld [vmem:[%s2 + $0x8] sm:$0xff]
  %v28 = vld [vmem:[%s2 + $0x10] sm:$0xff]
  %v29 = vld [vmem:[%s2 + $0x18] sm:$0xff]
  %v30 = vld [vmem:[%s2 + $0x20] sm:$0xff]
  %v31 = vld [vmem:[%s2 + $0x28] sm:$0xff]
  %v32 = vld [vmem:[%s2 + $0x30] sm:$0xff]
  %v33 = vld [vmem:[%s2 + $0x38] sm:$0xff]
  %vm34 = vcmask 523264
  %v36 = vsel %vm34, %v17, 0
  %38 = vmatprep.subr.mxu0 0.0
  %39 = vmatpush1.msra.mxu0 0.0
  %40 = vmatprep.subr.mxu0 0.0
  %41 = vmatpush1.msra.mxu0 0.0
  %42 = vmatprep.subr.mxu0 0.0
  %43 = vmatpush1.msra.mxu0 0.0
  %44 = vmatprep.subr.mxu0 0.0
  %45 = vmatpush1.msra.mxu0 0.0
  %46 = vmatprep.subr.mxu0 0.0
  %47 = vmatpush1.msra.mxu0 0.0
  %48 = vmatprep.subr.mxu0 0.0
  %49 = vmatpush1.msra.mxu0 0.0
  %50 = vmatprep.subr.mxu0 0.0
  %51 = vmatpush1.msra.mxu0 0.0
  %52 = vmatprep.subr.mxu0 0.0
  %53 = vmatpush1.msra.mxu0 0.0
  %54 = vmatprep.subr.mxu0 0.0
  %55 = vmatpush1.msra.mxu0 %v33
  %56 = vmatprep.subr.mxu0 0.0
  %57 = vmatpush1.msra.mxu0 %v32
  %58 = vmatprep.subr.mxu0 0.0
  %59 = vmatpush1.msra.mxu0 %v31
  %60 = vmatprep.subr.mxu0 0.0
  %61 = vmatpush1.msra.mxu0 %v30
  %62 = vmatprep.subr.mxu0 0.0
  %63 = vmatpush1.msra.mxu0 %v29
  %64 = vmatprep.subr.mxu0 0.0
  %65 = vmatpush1.msra.mxu0 %v28
  %66 = vmatprep.subr.mxu0 0.0
  %67 = vmatpush1.msra.mxu0 %v27
  %68 = vmatprep.subr.mxu0 0.0
  %69 = vmatpush1.msra.mxu0 %v26
  %70 = vmatprep.subr.mxu0 0.0
  %71 = vmatpush2.msra.mxu0 0.0
  %72 = vmatprep.subr.mxu0 0.0
  %73 = vmatpush2.msra.mxu0 0.0
  %74 = vmatprep.subr.mxu0 0.0
  %75 = vmatpush2.msra.mxu0 0.0
  %76 = vmatprep.subr.mxu0 0.0
  %77 = vmatpush2.msra.mxu0 0.0
  %78 = vmatprep.subr.mxu0 0.0
  %79 = vmatpush2.msra.mxu0 0.0
  %80 = vmatprep.subr.mxu0 0.0
  %81 = vmatpush2.msra.mxu0 0.0
  %82 = vmatprep.subr.mxu0 0.0
  %83 = vmatpush2.msra.mxu0 0.0
  %84 = vmatprep.subr.mxu0 0.0
  %85 = vmatpush2.msra.mxu0 0.0
  %86 = vmatprep.subr.mxu0 0.0
  %87 = vmatpush2.msra.mxu0 0.0
  %88 = vmatprep.subr.mxu0 0.0
  %89 = vmatpush2.msra.mxu0 0.0
  %90 = vmatprep.subr.mxu0 0.0
  %91 = vmatpush2.msra.mxu0 0.0
  %92 = vmatprep.subr.mxu0 0.0
  %93 = vmatpush2.msra.mxu0 0.0
  %94 = vmatprep.subr.mxu0 0.0
  %95 = vmatpush2.msra.mxu0 0.0
  %96 = vmatprep.subr.mxu0 0.0
  %97 = vmatpush2.msra.mxu0 0.0
  %98 = vmatprep.subr.mxu0 0.0
  %99 = vmatpush2.msra.mxu0 0.0
  %100 = vmatprep.subr.mxu0 0.0
  %101 = vmatpush2.msra.mxu0 0.0
  %102 = vmatprep.mubr.f32.mxu0 0.0
  %103 = vmatmul.mubr.f32.gmra.mxu0 %v36
  %v104 = vpop.f32.mrf.mxu0
  %v105 = vadd.f32 0.0, %v104
  %v106 = vpop.f32.mrf.mxu0
  %107 = vdwg.mxu0
  %v108 = vmul.f32 %v17, %v17
  %v110 = vsel %vm34, %v108, 0
  %112 = vmatprep.subr.mxu0 0.0
  %113 = vmatpush1.msra.mxu0 0.0
  %114 = vmatprep.subr.mxu0 0.0
  %115 = vmatpush1.msra.mxu0 0.0
  %116 = vmatprep.subr.mxu0 0.0
  %117 = vmatpush1.msra.mxu0 0.0
  %118 = vmatprep.subr.mxu0 0.0
  %119 = vmatpush1.msra.mxu0 0.0
  %120 = vmatprep.subr.mxu0 0.0
  %121 = vmatpush1.msra.mxu0 0.0
  %122 = vmatprep.subr.mxu0 0.0
  %123 = vmatpush1.msra.mxu0 0.0
  %124 = vmatprep.subr.mxu0 0.0
  %125 = vmatpush1.msra.mxu0 0.0
  %126 = vmatprep.subr.mxu0 0.0
  %127 = vmatpush1.msra.mxu0 0.0
  %128 = vmatprep.subr.mxu0 0.0
  %129 = vmatpush1.msra.mxu0 %v33
  %130 = vmatprep.subr.mxu0 0.0
  %131 = vmatpush1.msra.mxu0 %v32
  %132 = vmatprep.subr.mxu0 0.0
  %133 = vmatpush1.msra.mxu0 %v31
  %134 = vmatprep.subr.mxu0 0.0
  %135 = vmatpush1.msra.mxu0 %v30
  %136 = vmatprep.subr.mxu0 0.0
  %137 = vmatpush1.msra.mxu0 %v29
  %138 = vmatprep.subr.mxu0 0.0
  %139 = vmatpush1.msra.mxu0 %v28
  %140 = vmatprep.subr.mxu0 0.0
  %141 = vmatpush1.msra.mxu0 %v27
  %142 = vmatprep.subr.mxu0 0.0
  %143 = vmatpush1.msra.mxu0 %v26
  %144 = vmatprep.subr.mxu0 0.0
  %145 = vmatpush2.msra.mxu0 0.0
  %146 = vmatprep.subr.mxu0 0.0
  %147 = vmatpush2.msra.mxu0 0.0
  %148 = vmatprep.subr.mxu0 0.0
  %149 = vmatpush2.msra.mxu0 0.0
  %150 = vmatprep.subr.mxu0 0.0
  %151 = vmatpush2.msra.mxu0 0.0
  %152 = vmatprep.subr.mxu0 0.0
  %153 = vmatpush2.msra.mxu0 0.0
  %154 = vmatprep.subr.mxu0 0.0
  %155 = vmatpush2.msra.mxu0 0.0
  %156 = vmatprep.subr.mxu0 0.0
  %157 = vmatpush2.msra.mxu0 0.0
  %158 = vmatprep.subr.mxu0 0.0
  %159 = vmatpush2.msra.mxu0 0.0
  %160 = vmatprep.subr.mxu0 0.0
  %161 = vmatpush2.msra.mxu0 0.0
  %162 = vmatprep.subr.mxu0 0.0
  %163 = vmatpush2.msra.mxu0 0.0
  %164 = vmatprep.subr.mxu0 0.0
  %165 = vmatpush2.msra.mxu0 0.0
  %166 = vmatprep.subr.mxu0 0.0
  %167 = vmatpush2.msra.mxu0 0.0
  %168 = vmatprep.subr.mxu0 0.0
  %169 = vmatpush2.msra.mxu0 0.0
  %170 = vmatprep.subr.mxu0 0.0
  %171 = vmatpush2.msra.mxu0 0.0
  %172 = vmatprep.subr.mxu0 0.0
  %173 = vmatpush2.msra.mxu0 0.0
  %174 = vmatprep.subr.mxu0 0.0
  %175 = vmatpush2.msra.mxu0 0.0
  %176 = vmatprep.mubr.f32.mxu0 0.0
  %177 = vmatmul.mubr.f32.gmra.mxu0 %v110
  %v178 = vpop.f32.mrf.mxu0
  %v179 = vadd.f32 0.0, %v178
  %v180 = vpop.f32.mrf.mxu0
  %181 = vdwg.mxu0
  %v182 = vmul.f32 %v105, %v105
  %v183 = vsub.f32 %v179, %v182
  %v184 = vadd.f32 %v183, 1e-05
  %v185 = vrsqrt.pop %v184
  %v186 = vmul.f32 %v184, %v185
  %vm187 = vcmp.eq.f32.partialorder %v184, inf
  %v188 = vsel %vm187, %v184, %v186
  %vm189 = vcmp.eq.f32.partialorder %v184, 0.0
  %v190 = vand.u32 %v184, 2147483648
  %v191 = vsel %vm189, %v190, %v188
  %v192 = vld [vmem:[%s3] sm:$0x1]
  %v194 = vlaneseq
  %v195 = vshrl.u32 %v194, 7
  %v196 = vsub.s32 0, %v195
  %v197 = vrot.slane %v192, %v196
  %v199 = vmul.f32 %v197, %v191
  %200 = vmatprep.subr.mxu0 0.0
  %201 = vmatpush1.msra.mxu0 0.0
  %202 = vmatprep.subr.mxu0 0.0
  %203 = vmatpush1.msra.mxu0 0.0
  %204 = vmatprep.subr.mxu0 0.0
  %205 = vmatpush1.msra.mxu0 0.0
  %206 = vmatprep.subr.mxu0 0.0
  %207 = vmatpush1.msra.mxu0 0.0
  %208 = vmatprep.subr.mxu0 0.0
  %209 = vmatpush1.msra.mxu0 0.0
  %210 = vmatprep.subr.mxu0 0.0
  %211 = vmatpush1.msra.mxu0 0.0
  %212 = vmatprep.subr.mxu0 0.0
  %213 = vmatpush1.msra.mxu0 0.0
  %214 = vmatprep.subr.mxu0 0.0
  %215 = vmatpush1.msra.mxu0 0.0
  %216 = vmatprep.subr.mxu0 0.0
  %217 = vmatpush1.msra.mxu0 %v25
  %218 = vmatprep.subr.mxu0 0.0
  %219 = vmatpush1.msra.mxu0 %v24
  %220 = vmatprep.subr.mxu0 0.0
  %221 = vmatpush1.msra.mxu0 %v23
  %222 = vmatprep.subr.mxu0 0.0
  %223 = vmatpush1.msra.mxu0 %v22
  %224 = vmatprep.subr.mxu0 0.0
  %225 = vmatpush1.msra.mxu0 %v21
  %226 = vmatprep.subr.mxu0 0.0
  %227 = vmatpush1.msra.mxu0 %v20
  %228 = vmatprep.subr.mxu0 0.0
  %229 = vmatpush1.msra.mxu0 %v19
  %230 = vmatprep.subr.mxu0 0.0
  %231 = vmatpush1.msra.mxu0 %v18
  %232 = vmatprep.subr.mxu0 0.0
  %233 = vmatpush2.msra.mxu0 0.0
  %234 = vmatprep.subr.mxu0 0.0
  %235 = vmatpush2.msra.mxu0 0.0
  %236 = vmatprep.subr.mxu0 0.0
  %237 = vmatpush2.msra.mxu0 0.0
  %238 = vmatprep.subr.mxu0 0.0
  %239 = vmatpush2.msra.mxu0 0.0
  %240 = vmatprep.subr.mxu0 0.0
  %241 = vmatpush2.msra.mxu0 0.0
  %242 = vmatprep.subr.mxu0 0.0
  %243 = vmatpush2.msra.mxu0 0.0
  %244 = vmatprep.subr.mxu0 0.0
  %245 = vmatpush2.msra.mxu0 0.0
  %246 = vmatprep.subr.mxu0 0.0
  %247 = vmatpush2.msra.mxu0 0.0
  %248 = vmatprep.subr.mxu0 0.0
  %249 = vmatpush2.msra.mxu0 0.0
  %250 = vmatprep.subr.mxu0 0.0
  %251 = vmatpush2.msra.mxu0 0.0
  %252 = vmatprep.subr.mxu0 0.0
  %253 = vmatpush2.msra.mxu0 0.0
  %254 = vmatprep.subr.mxu0 0.0
  %255 = vmatpush2.msra.mxu0 0.0
  %256 = vmatprep.subr.mxu0 0.0
  %257 = vmatpush2.msra.mxu0 0.0
  %258 = vmatprep.subr.mxu0 0.0
  %259 = vmatpush2.msra.mxu0 0.0
  %260 = vmatprep.subr.mxu0 0.0
  %261 = vmatpush2.msra.mxu0 0.0
  %262 = vmatprep.subr.mxu0 0.0
  %263 = vmatpush2.msra.mxu0 0.0
  %264 = vmatprep.mubr.f32.mxu0 0.0
  %265 = vmatmul.mubr.f32.gmra.mxu0 %v36
  %v266 = vpop.f32.mrf.mxu0
  %v267 = vadd.f32 %v199, %v266
  %v268 = vpop.f32.mrf.mxu0
  %269 = vdwg.mxu0
  %vm270 = vcmask 254976
  %271 = vst.msk [vmem:[%s4] sm:$0x3] %vm270, %v267
  // Predicated region
  $region18: #{point_id_ar_forward.1} parent=0 // pred_check
    _
  $region19: #{point_id_ar_forward.1} parent=0 // pred_check_branch
    %273 = sbr.rel (0) target = $region21
  $region20: #{point_id_ar_forward.1} parent=0 // pred_region
    _
  $region21: #{point_id_ar_forward.1} parent=0 // pred_fallthru
    _
  // Predicated region
  $region22: #{point_id_ar_forward.1} parent=0 // pred_check
    _
  $region23: #{point_id_ar_forward.1} parent=0 // pred_check_branch
    %275 = sbr.rel (0) target = $region25
  $region24: #{point_id_ar_forward.1} parent=0 // pred_region
    _
  $region25: #{point_id_ar_forward.1} parent=0 // pred_fallthru
    _

</llo_original>
